<compile_context>
chip_gen: v5e
topology: v5e:2x2
jax: 0.10.0
libtpu: 0.0.40
codegen_flags: <defaults>
</compile_context>

<pallas_src>
import functools
import math

import jax
import jax.numpy as jnp
from jax.experimental import pallas as pl
from jax.experimental.pallas import tpu as pltpu


def _mha_kernel(x_ref,
                wq_ref, bq_ref,
                wk_ref, bk_ref,
                wv_ref, bv_ref,
                wo_ref, bo_ref,
                o_ref,
                *, num_heads):
    """Fused kernel: (fused) Q/K/V projections + per-head attention + out-proj.

    Shapes per grid step:
      x_ref : (Bt, S, E)   bf16
      wq/wk/wv_ref : (E, E) bf16   (pre-fused, pre-transposed; wq pre-scaled)
      bq/bk/bv_ref : (1, E) f32    (pre-fused biases; bq pre-scaled)
      wo_ref : (H, D, E) bf16      (out-proj weight, pre-transposed, per-head)
      bo_ref : (1, E) f32
      o_ref : (Bt, S, E)  f32
    """
    Bt, S, E = x_ref.shape
    H = num_heads
    D = E // H

    # Merge (Bt, S) -> rows: free reshape (minor dim unchanged); one GEMM/stream.
    x = x_ref[...].reshape(Bt * S, E)

    q = jnp.dot(x, wq_ref[...], preferred_element_type=jnp.float32) + bq_ref[...]
    k = jnp.dot(x, wk_ref[...], preferred_element_type=jnp.float32) + bk_ref[...]
    v = jnp.dot(x, wv_ref[...], preferred_element_type=jnp.float32) + bv_ref[...]

    qb = q.astype(jnp.bfloat16)
    kb = k.astype(jnp.bfloat16)
    vb = v.astype(jnp.bfloat16)

    wo = wo_ref[...]          # (H, D, E) bf16
    bo = bo_ref[...]          # (1, E)   f32

    # Attention is independent per batch element (static, small unroll over Bt).
    for b in range(Bt):
        r0 = b * S
        # Head-separated views (H, S, D); head h lives in lanes h*D:(h+1)*D.
        qs = jnp.stack([qb[r0:r0 + S, h * D:(h + 1) * D] for h in range(H)], axis=0)
        ks = jnp.stack([kb[r0:r0 + S, h * D:(h + 1) * D] for h in range(H)], axis=0)
        vs = jnp.stack([vb[r0:r0 + S, h * D:(h + 1) * D] for h in range(H)], axis=0)

        # Head-batched scores; 1/sqrt(D) already folded into the query weights.
        s = jnp.einsum('hqd,hkd->hqk', qs, ks,
                       preferred_element_type=jnp.float32)            # (H, S, S) f32
        s = s - jnp.max(s, axis=-1, keepdims=True)
        p = jnp.exp(s)
        inv_l = pl.reciprocal(jnp.sum(p, axis=-1, keepdims=True), approx=True)

        ctx = jnp.einsum('hqk,hkd->hqd', p.astype(jnp.bfloat16), vs,
                         preferred_element_type=jnp.float32)           # (H, S, D) f32
        ctx = (ctx * inv_l).astype(jnp.bfloat16)

        # Output projection: sum_h ctx_h @ Wo^T[h*D:(h+1)*D, :] — no lane concat.
        acc = jnp.dot(ctx[0], wo[0], preferred_element_type=jnp.float32)
        for h in range(1, H):
            acc = acc + jnp.dot(ctx[h], wo[h], preferred_element_type=jnp.float32)

        o_ref[b] = (acc + bo).astype(o_ref.dtype)


def multihead_attention(x, params, num_heads, block_batch=None):
    """Pallas forward. Returns (attn_output, None) like the PyTorch module."""
    B, S, E = x.shape
    H = num_heads
    assert E % H == 0
    D = E // H
    scale = 1.0 / math.sqrt(D)

    wq, bq, wk, bk, wv, bv, w_in, b_in, wo, bo = params

    # ---- wrapper-side weight fusion / pre-transposition (done once, in f32) ----
    wq_in, wk_in, wv_in = w_in[:E], w_in[E:2 * E], w_in[2 * E:]
    bq_in, bk_in, bv_in = b_in[:E], b_in[E:2 * E], b_in[2 * E:]

    wq_t = (scale * (wq_in @ wq)).T.astype(jnp.bfloat16)          # (E, E)
    wk_t = (wk_in @ wk).T.astype(jnp.bfloat16)                    # (E, E)
    wv_t = (wv_in @ wv).T.astype(jnp.bfloat16)                    # (E, E)
    bq_e = (scale * (wq_in @ bq + bq_in)).reshape(1, E).astype(jnp.float32)
    bk_e = (wk_in @ bk + bk_in).reshape(1, E).astype(jnp.float32)
    bv_e = (wv_in @ bv + bv_in).reshape(1, E).astype(jnp.float32)
    wo_h = wo.T.reshape(H, D, E).astype(jnp.bfloat16)             # per-head slabs of Wo^T
    bo_e = bo.reshape(1, E).astype(jnp.float32)

    x_bf = x.astype(jnp.bfloat16)

    # ---- batch blocking: several batch rows per grid step ----
    if block_batch is None:
        block_batch = min(B, max(1, 256 // max(S, 1)))
    Bt = max(1, min(block_batch, B))
    while B % Bt:                       # keep the grid exact
        Bt -= 1
    grid = (B // Bt,)

    def const_spec(shape):
        nd = len(shape)
        return pl.BlockSpec(shape, lambda i, _nd=nd: (0,) * _nd)

    in_specs = [
        pl.BlockSpec((Bt, S, E), lambda i: (i, 0, 0)),   # x block
        const_spec((E, E)), const_spec((1, E)),          # fused query proj
        const_spec((E, E)), const_spec((1, E)),          # fused key proj
        const_spec((E, E)), const_spec((1, E)),          # fused value proj
        const_spec((H, D, E)), const_spec((1, E)),       # out proj (per-head)
    ]
    out_specs = pl.BlockSpec((Bt, S, E), lambda i: (i, 0, 0))

    # Advisory cost estimate for the XLA scheduler.
    flops = int(2 * B * S * E * E * 4 + 4 * B * H * S * S * D)
    transcendentals = int(B * H * S * S)
    bytes_accessed = int(B * S * E * 2            # x (bf16)
                         + B * S * E * 4          # out (f32)
                         + 4 * E * E * 2          # weights (bf16)
                         + 4 * E * 4)             # biases (f32)

    kernel = functools.partial(_mha_kernel, num_heads=num_heads)
    out = pl.pallas_call(
        kernel,
        out_shape=jax.ShapeDtypeStruct((B, S, E), x.dtype),
        grid=grid,
        in_specs=in_specs,
        out_specs=out_specs,
        compiler_params=pltpu.CompilerParams(dimension_semantics=("parallel",)),
        cost_estimate=pl.CostEstimate(flops=flops,
                                      transcendentals=transcendentals,
                                      bytes_accessed=bytes_accessed),
    )(x_bf, wq_t, bq_e, wk_t, bk_e, wv_t, bv_e, wo_h, bo_e)
    return out, None  # need_weights=False -> attention weights are None


def _reference(x, params, num_heads):
    """Pure-JAX (f32) reference matching PyTorch nn.MultiheadAttention semantics."""
    wq, bq, wk, bk, wv, bv, w_in, b_in, wo, bo = params
    B, S, E = x.shape
    H, D = num_heads, E // num_heads
    q = x @ wq.T + bq
    k = x @ wk.T + bk
    v = x @ wv.T + bv
    q2 = q @ w_in[:E].T + b_in[:E]
    k2 = k @ w_in[E:2 * E].T + b_in[E:2 * E]
    v2 = v @ w_in[2 * E:].T + b_in[2 * E:]
    q2 = q2.reshape(B, S, H, D).transpose(0, 2, 1, 3) / math.sqrt(D)
    k2 = k2.reshape(B, S, H, D).transpose(0, 2, 1, 3)
    v2 = v2.reshape(B, S, H, D).transpose(0, 2, 1, 3)
    s = jnp.einsum('bhqd,bhkd->bhqk', q2, k2)
    p = jax.nn.softmax(s, axis=-1)
    ctx = jnp.einsum('bhqk,bhkd->bhqd', p, v2).transpose(0, 2, 1, 3).reshape(B, S, E)
    return ctx @ wo.T + bo


def init_params(key, features_size):
    """Deterministic, PyTorch-shaped parameter initialization."""
    E = features_size
    keys = jax.random.split(key, 10)
    lin = 1.0 / math.sqrt(E)

    def u(k, shape, bound):
        return jax.random.uniform(k, shape, jnp.float32, -bound, bound)

    wq, bq = u(keys[0], (E, E), lin), u(keys[1], (E,), lin)
    wk, bk = u(keys[2], (E, E), lin), u(keys[3], (E,), lin)
    wv, bv = u(keys[4], (E, E), lin), u(keys[5], (E,), lin)
    w_in = u(keys[6], (3 * E, E), lin)          # attn.in_proj_weight
    b_in = jnp.zeros((3 * E,), jnp.float32)     # attn.in_proj_bias (torch inits to 0)
    wo = u(keys[7], (E, E), lin)                # attn.out_proj.weight
    bo = jnp.zeros((E,), jnp.float32)           # attn.out_proj.bias (torch inits to 0)
    return (wq, bq, wk, bk, wv, bv, w_in, b_in, wo, bo)


if __name__ == "__main__":
    B, S, E, H = 2, 8, 32, 4

    key = jax.random.PRNGKey(0)
    kx, kp = jax.random.split(key)
    x = jax.random.normal(kx, (B, S, E), jnp.float32)
    params = init_params(kp, E)

    out, attn_weights = multihead_attention(x, params, num_heads=H)
    out = jax.block_until_ready(out)

    ref = _reference(x, params, num_heads=H)
    assert out.shape == (B, S, E)
    assert attn_weights is None
    # bf16 matmul inputs + approx reciprocal => slightly looser tolerance vs f32 ref.
    assert jnp.allclose(out, ref, rtol=2e-2, atol=2e-2), "mismatch vs JAX reference"

    print("KERNEL_OK")
</pallas_src>

<mosaic_0001>
module attributes {stable_mosaic.version = 11 : i64} {
  func.func @_mha_kernel(%arg0: i32, %arg1: memref<2x8x32xbf16, #tpu.memory_space<vmem>>, %arg2: memref<32x32xbf16, #tpu.memory_space<vmem>>, %arg3: memref<1x32xf32, #tpu.memory_space<vmem>>, %arg4: memref<32x32xbf16, #tpu.memory_space<vmem>>, %arg5: memref<1x32xf32, #tpu.memory_space<vmem>>, %arg6: memref<32x32xbf16, #tpu.memory_space<vmem>>, %arg7: memref<1x32xf32, #tpu.memory_space<vmem>>, %arg8: memref<4x8x32xbf16, #tpu.memory_space<vmem>>, %arg9: memref<1x32xf32, #tpu.memory_space<vmem>>, %arg10: memref<2x8x32xf32, #tpu.memory_space<vmem>>) attributes {dimension_semantics = [#tpu.dimension_semantics<parallel>], iteration_bounds = array<i64: 1>, scalar_prefetch = 0 : i64, scratch_operands = 0 : i64, tpu.core_type = #tpu.core_type<tc>, window_params = [{transform_indices = @transform_0, window_bounds = array<i64: 2, 8, 32>}, {pipeline_mode = #tpu.pipeline_mode<synchronous>, transform_indices = @transform_1, window_bounds = array<i64: 32, 32>}, {pipeline_mode = #tpu.pipeline_mode<synchronous>, transform_indices = @transform_2, window_bounds = array<i64: 1, 32>}, {pipeline_mode = #tpu.pipeline_mode<synchronous>, transform_indices = @transform_3, window_bounds = array<i64: 32, 32>}, {pipeline_mode = #tpu.pipeline_mode<synchronous>, transform_indices = @transform_4, window_bounds = array<i64: 1, 32>}, {pipeline_mode = #tpu.pipeline_mode<synchronous>, transform_indices = @transform_5, window_bounds = array<i64: 32, 32>}, {pipeline_mode = #tpu.pipeline_mode<synchronous>, transform_indices = @transform_6, window_bounds = array<i64: 1, 32>}, {pipeline_mode = #tpu.pipeline_mode<synchronous>, transform_indices = @transform_7, window_bounds = array<i64: 4, 8, 32>}, {pipeline_mode = #tpu.pipeline_mode<synchronous>, transform_indices = @transform_8, window_bounds = array<i64: 1, 32>}, {transform_indices = @transform_9, window_bounds = array<i64: 2, 8, 32>}]} {
    %c0 = arith.constant 0 : index
    %c0_0 = arith.constant 0 : index
    %c0_1 = arith.constant 0 : index
    %0 = vector.load %arg1[%c0, %c0_0, %c0_1] : memref<2x8x32xbf16, #tpu.memory_space<vmem>>, vector<2x8x32xbf16>
    %1 = vector.shape_cast %0 : vector<2x8x32xbf16> to vector<16x32xbf16>
    %c0_2 = arith.constant 0 : index
    %c0_3 = arith.constant 0 : index
    %2 = vector.load %arg2[%c0_2, %c0_3] : memref<32x32xbf16, #tpu.memory_space<vmem>>, vector<32x32xbf16>
    %cst = arith.constant dense<0.000000e+00> : vector<16x32xf32>
    %3 = tpu.matmul %1, %2, %cst {dimension_numbers = #tpu.dot_dimension_numbers<[1], [0], [0], [1], [0, 0, 1, 1], [], []>} : vector<16x32xbf16>, vector<32x32xbf16>, vector<16x32xf32> -> vector<16x32xf32>
    %c0_4 = arith.constant 0 : index
    %c0_5 = arith.constant 0 : index
    %4 = vector.load %arg3[%c0_4, %c0_5] : memref<1x32xf32, #tpu.memory_space<vmem>>, vector<1x32xf32>
    %5 = vector.broadcast %4 : vector<1x32xf32> to vector<16x32xf32>
    %6 = arith.addf %3, %5 : vector<16x32xf32>
    %c0_6 = arith.constant 0 : index
    %c0_7 = arith.constant 0 : index
    %7 = vector.load %arg4[%c0_6, %c0_7] : memref<32x32xbf16, #tpu.memory_space<vmem>>, vector<32x32xbf16>
    %cst_8 = arith.constant dense<0.000000e+00> : vector<16x32xf32>
    %8 = tpu.matmul %1, %7, %cst_8 {dimension_numbers = #tpu.dot_dimension_numbers<[1], [0], [0], [1], [0, 0, 1, 1], [], []>} : vector<16x32xbf16>, vector<32x32xbf16>, vector<16x32xf32> -> vector<16x32xf32>
    %c0_9 = arith.constant 0 : index
    %c0_10 = arith.constant 0 : index
    %9 = vector.load %arg5[%c0_9, %c0_10] : memref<1x32xf32, #tpu.memory_space<vmem>>, vector<1x32xf32>
    %10 = vector.broadcast %9 : vector<1x32xf32> to vector<16x32xf32>
    %11 = arith.addf %8, %10 : vector<16x32xf32>
    %c0_11 = arith.constant 0 : index
    %c0_12 = arith.constant 0 : index
    %12 = vector.load %arg6[%c0_11, %c0_12] : memref<32x32xbf16, #tpu.memory_space<vmem>>, vector<32x32xbf16>
    %cst_13 = arith.constant dense<0.000000e+00> : vector<16x32xf32>
    %13 = tpu.matmul %1, %12, %cst_13 {dimension_numbers = #tpu.dot_dimension_numbers<[1], [0], [0], [1], [0, 0, 1, 1], [], []>} : vector<16x32xbf16>, vector<32x32xbf16>, vector<16x32xf32> -> vector<16x32xf32>
    %c0_14 = arith.constant 0 : index
    %c0_15 = arith.constant 0 : index
    %14 = vector.load %arg7[%c0_14, %c0_15] : memref<1x32xf32, #tpu.memory_space<vmem>>, vector<1x32xf32>
    %15 = vector.broadcast %14 : vector<1x32xf32> to vector<16x32xf32>
    %16 = arith.addf %13, %15 : vector<16x32xf32>
    %17 = arith.truncf %6 : vector<16x32xf32> to vector<16x32xbf16>
    %18 = arith.truncf %11 : vector<16x32xf32> to vector<16x32xbf16>
    %19 = arith.truncf %16 : vector<16x32xf32> to vector<16x32xbf16>
    %c0_16 = arith.constant 0 : index
    %c0_17 = arith.constant 0 : index
    %c0_18 = arith.constant 0 : index
    %20 = vector.load %arg8[%c0_16, %c0_17, %c0_18] : memref<4x8x32xbf16, #tpu.memory_space<vmem>>, vector<4x8x32xbf16>
    %c0_19 = arith.constant 0 : index
    %c0_20 = arith.constant 0 : index
    %21 = vector.load %arg9[%c0_19, %c0_20] : memref<1x32xf32, #tpu.memory_space<vmem>>, vector<1x32xf32>
    %22 = vector.extract_strided_slice %17 {offsets = [0, 0], sizes = [8, 8], strides = [1, 1]} : vector<16x32xbf16> to vector<8x8xbf16>
    %23 = vector.extract_strided_slice %17 {offsets = [0, 8], sizes = [8, 8], strides = [1, 1]} : vector<16x32xbf16> to vector<8x8xbf16>
    %24 = vector.extract_strided_slice %17 {offsets = [0, 16], sizes = [8, 8], strides = [1, 1]} : vector<16x32xbf16> to vector<8x8xbf16>
    %25 = vector.extract_strided_slice %17 {offsets = [0, 24], sizes = [8, 8], strides = [1, 1]} : vector<16x32xbf16> to vector<8x8xbf16>
    %26 = vector.shape_cast %22 : vector<8x8xbf16> to vector<1x8x8xbf16>
    %27 = vector.shape_cast %23 : vector<8x8xbf16> to vector<1x8x8xbf16>
    %28 = vector.shape_cast %24 : vector<8x8xbf16> to vector<1x8x8xbf16>
    %29 = vector.shape_cast %25 : vector<8x8xbf16> to vector<1x8x8xbf16>
    %30 = tpu.concatenate %26, %27, %28, %29 in 0 : vector<1x8x8xbf16>, vector<1x8x8xbf16>, vector<1x8x8xbf16>, vector<1x8x8xbf16> -> vector<4x8x8xbf16>
    %31 = vector.extract_strided_slice %18 {offsets = [0, 0], sizes = [8, 8], strides = [1, 1]} : vector<16x32xbf16> to vector<8x8xbf16>
    %32 = vector.extract_strided_slice %18 {offsets = [0, 8], sizes = [8, 8], strides = [1, 1]} : vector<16x32xbf16> to vector<8x8xbf16>
    %33 = vector.extract_strided_slice %18 {offsets = [0, 16], sizes = [8, 8], strides = [1, 1]} : vector<16x32xbf16> to vector<8x8xbf16>
    %34 = vector.extract_strided_slice %18 {offsets = [0, 24], sizes = [8, 8], strides = [1, 1]} : vector<16x32xbf16> to vector<8x8xbf16>
    %35 = vector.shape_cast %31 : vector<8x8xbf16> to vector<1x8x8xbf16>
    %36 = vector.shape_cast %32 : vector<8x8xbf16> to vector<1x8x8xbf16>
    %37 = vector.shape_cast %33 : vector<8x8xbf16> to vector<1x8x8xbf16>
    %38 = vector.shape_cast %34 : vector<8x8xbf16> to vector<1x8x8xbf16>
    %39 = tpu.concatenate %35, %36, %37, %38 in 0 : vector<1x8x8xbf16>, vector<1x8x8xbf16>, vector<1x8x8xbf16>, vector<1x8x8xbf16> -> vector<4x8x8xbf16>
    %40 = vector.extract_strided_slice %19 {offsets = [0, 0], sizes = [8, 8], strides = [1, 1]} : vector<16x32xbf16> to vector<8x8xbf16>
    %41 = vector.extract_strided_slice %19 {offsets = [0, 8], sizes = [8, 8], strides = [1, 1]} : vector<16x32xbf16> to vector<8x8xbf16>
    %42 = vector.extract_strided_slice %19 {offsets = [0, 16], sizes = [8, 8], strides = [1, 1]} : vector<16x32xbf16> to vector<8x8xbf16>
    %43 = vector.extract_strided_slice %19 {offsets = [0, 24], sizes = [8, 8], strides = [1, 1]} : vector<16x32xbf16> to vector<8x8xbf16>
    %44 = vector.shape_cast %40 : vector<8x8xbf16> to vector<1x8x8xbf16>
    %45 = vector.shape_cast %41 : vector<8x8xbf16> to vector<1x8x8xbf16>
    %46 = vector.shape_cast %42 : vector<8x8xbf16> to vector<1x8x8xbf16>
    %47 = vector.shape_cast %43 : vector<8x8xbf16> to vector<1x8x8xbf16>
    %48 = tpu.concatenate %44, %45, %46, %47 in 0 : vector<1x8x8xbf16>, vector<1x8x8xbf16>, vector<1x8x8xbf16>, vector<1x8x8xbf16> -> vector<4x8x8xbf16>
    "tpu.trace_start"() <{level = 10 : i32, message = "hqd,hkd->hqk"}> : () -> ()
    %cst_21 = arith.constant dense<0.000000e+00> : vector<4x8x8xf32>
    %49 = tpu.matmul %30, %39, %cst_21 {dimension_numbers = #tpu.dot_dimension_numbers<[2], [2], [1], [1], [0, 0, 0, 1, 1, 1], [0], [0]>} : vector<4x8x8xbf16>, vector<4x8x8xbf16>, vector<4x8x8xf32> -> vector<4x8x8xf32>
    "tpu.trace_stop"() : () -> ()
    %cst_22 = arith.constant dense<0xFF800000> : vector<4x8xf32>
    %50 = vector.multi_reduction <maximumf>, %49, %cst_22 [2] : vector<4x8x8xf32> to vector<4x8xf32>
    %51 = vector.shape_cast %50 : vector<4x8xf32> to vector<4x8x1xf32>
    %52 = vector.broadcast %51 : vector<4x8x1xf32> to vector<4x8x8xf32>
    %53 = arith.subf %49, %52 : vector<4x8x8xf32>
    %54 = math.exp %53 : vector<4x8x8xf32>
    %cst_23 = arith.constant dense<0.000000e+00> : vector<4x8xf32>
    %55 = vector.multi_reduction <add>, %54, %cst_23 [2] : vector<4x8x8xf32> to vector<4x8xf32>
    %56 = vector.shape_cast %55 : vector<4x8xf32> to vector<4x8x1xf32>
    %57 = tpu.reciprocal %56 {approx = true} : vector<4x8x1xf32> -> vector<4x8x1xf32>
    %58 = arith.truncf %54 : vector<4x8x8xf32> to vector<4x8x8xbf16>
    "tpu.trace_start"() <{level = 10 : i32, message = "hqk,hkd->hqd"}> : () -> ()
    %cst_24 = arith.constant dense<0.000000e+00> : vector<4x8x8xf32>
    %59 = tpu.matmul %58, %48, %cst_24 {dimension_numbers = #tpu.dot_dimension_numbers<[2], [1], [1], [2], [0, 0, 0, 1, 1, 2], [0], [0]>} : vector<4x8x8xbf16>, vector<4x8x8xbf16>, vector<4x8x8xf32> -> vector<4x8x8xf32>
    "tpu.trace_stop"() : () -> ()
    %60 = vector.broadcast %57 : vector<4x8x1xf32> to vector<4x8x8xf32>
    %61 = arith.mulf %59, %60 : vector<4x8x8xf32>
    %62 = arith.truncf %61 : vector<4x8x8xf32> to vector<4x8x8xbf16>
    %63 = vector.extract_strided_slice %62 {offsets = [0, 0, 0], sizes = [1, 8, 8], strides = [1, 1, 1]} : vector<4x8x8xbf16> to vector<1x8x8xbf16>
    %64 = vector.shape_cast %63 : vector<1x8x8xbf16> to vector<8x8xbf16>
    %65 = vector.extract_strided_slice %20 {offsets = [0, 0, 0], sizes = [1, 8, 32], strides = [1, 1, 1]} : vector<4x8x32xbf16> to vector<1x8x32xbf16>
    %66 = vector.shape_cast %65 : vector<1x8x32xbf16> to vector<8x32xbf16>
    %cst_25 = arith.constant dense<0.000000e+00> : vector<8x32xf32>
    %67 = tpu.matmul %64, %66, %cst_25 {dimension_numbers = #tpu.dot_dimension_numbers<[1], [0], [0], [1], [0, 0, 1, 1], [], []>} : vector<8x8xbf16>, vector<8x32xbf16>, vector<8x32xf32> -> vector<8x32xf32>
    %68 = vector.extract_strided_slice %62 {offsets = [1, 0, 0], sizes = [1, 8, 8], strides = [1, 1, 1]} : vector<4x8x8xbf16> to vector<1x8x8xbf16>
    %69 = vector.shape_cast %68 : vector<1x8x8xbf16> to vector<8x8xbf16>
    %70 = vector.extract_strided_slice %20 {offsets = [1, 0, 0], sizes = [1, 8, 32], strides = [1, 1, 1]} : vector<4x8x32xbf16> to vector<1x8x32xbf16>
    %71 = vector.shape_cast %70 : vector<1x8x32xbf16> to vector<8x32xbf16>
    %cst_26 = arith.constant dense<0.000000e+00> : vector<8x32xf32>
    %72 = tpu.matmul %69, %71, %cst_26 {dimension_numbers = #tpu.dot_dimension_numbers<[1], [0], [0], [1], [0, 0, 1, 1], [], []>} : vector<8x8xbf16>, vector<8x32xbf16>, vector<8x32xf32> -> vector<8x32xf32>
    %73 = arith.addf %67, %72 : vector<8x32xf32>
    %74 = vector.extract_strided_slice %62 {offsets = [2, 0, 0], sizes = [1, 8, 8], strides = [1, 1, 1]} : vector<4x8x8xbf16> to vector<1x8x8xbf16>
    %75 = vector.shape_cast %74 : vector<1x8x8xbf16> to vector<8x8xbf16>
    %76 = vector.extract_strided_slice %20 {offsets = [2, 0, 0], sizes = [1, 8, 32], strides = [1, 1, 1]} : vector<4x8x32xbf16> to vector<1x8x32xbf16>
    %77 = vector.shape_cast %76 : vector<1x8x32xbf16> to vector<8x32xbf16>
    %cst_27 = arith.constant dense<0.000000e+00> : vector<8x32xf32>
    %78 = tpu.matmul %75, %77, %cst_27 {dimension_numbers = #tpu.dot_dimension_numbers<[1], [0], [0], [1], [0, 0, 1, 1], [], []>} : vector<8x8xbf16>, vector<8x32xbf16>, vector<8x32xf32> -> vector<8x32xf32>
    %79 = arith.addf %73, %78 : vector<8x32xf32>
    %80 = vector.extract_strided_slice %62 {offsets = [3, 0, 0], sizes = [1, 8, 8], strides = [1, 1, 1]} : vector<4x8x8xbf16> to vector<1x8x8xbf16>
    %81 = vector.shape_cast %80 : vector<1x8x8xbf16> to vector<8x8xbf16>
    %82 = vector.extract_strided_slice %20 {offsets = [3, 0, 0], sizes = [1, 8, 32], strides = [1, 1, 1]} : vector<4x8x32xbf16> to vector<1x8x32xbf16>
    %83 = vector.shape_cast %82 : vector<1x8x32xbf16> to vector<8x32xbf16>
    %cst_28 = arith.constant dense<0.000000e+00> : vector<8x32xf32>
    %84 = tpu.matmul %81, %83, %cst_28 {dimension_numbers = #tpu.dot_dimension_numbers<[1], [0], [0], [1], [0, 0, 1, 1], [], []>} : vector<8x8xbf16>, vector<8x32xbf16>, vector<8x32xf32> -> vector<8x32xf32>
    %85 = arith.addf %79, %84 : vector<8x32xf32>
    %86 = vector.broadcast %21 : vector<1x32xf32> to vector<8x32xf32>
    %87 = arith.addf %85, %86 : vector<8x32xf32>
    %c0_29 = arith.constant 0 : index
    %c0_30 = arith.constant 0 : index
    %c0_31 = arith.constant 0 : index
    %88 = vector.load %arg10[%c0_29, %c0_30, %c0_31] : memref<2x8x32xf32, #tpu.memory_space<vmem>>, vector<1x8x32xf32>
    %89 = vector.shape_cast %88 : vector<1x8x32xf32> to vector<8x32xf32>
    %90 = vector.shape_cast %87 : vector<8x32xf32> to vector<1x8x32xf32>
    tpu.vector_store %arg10[%c0_29, %c0_30, %c0_31], %90 {strides = array<i32>} : memref<2x8x32xf32, #tpu.memory_space<vmem>>, vector<1x8x32xf32>,
    %91 = vector.extract_strided_slice %17 {offsets = [8, 0], sizes = [8, 8], strides = [1, 1]} : vector<16x32xbf16> to vector<8x8xbf16>
    %92 = vector.extract_strided_slice %17 {offsets = [8, 8], sizes = [8, 8], strides = [1, 1]} : vector<16x32xbf16> to vector<8x8xbf16>
    %93 = vector.extract_strided_slice %17 {offsets = [8, 16], sizes = [8, 8], strides = [1, 1]} : vector<16x32xbf16> to vector<8x8xbf16>
    %94 = vector.extract_strided_slice %17 {offsets = [8, 24], sizes = [8, 8], strides = [1, 1]} : vector<16x32xbf16> to vector<8x8xbf16>
    %95 = vector.shape_cast %91 : vector<8x8xbf16> to vector<1x8x8xbf16>
    %96 = vector.shape_cast %92 : vector<8x8xbf16> to vector<1x8x8xbf16>
    %97 = vector.shape_cast %93 : vector<8x8xbf16> to vector<1x8x8xbf16>
    %98 = vector.shape_cast %94 : vector<8x8xbf16> to vector<1x8x8xbf16>
    %99 = tpu.concatenate %95, %96, %97, %98 in 0 : vector<1x8x8xbf16>, vector<1x8x8xbf16>, vector<1x8x8xbf16>, vector<1x8x8xbf16> -> vector<4x8x8xbf16>
    %100 = vector.extract_strided_slice %18 {offsets = [8, 0], sizes = [8, 8], strides = [1, 1]} : vector<16x32xbf16> to vector<8x8xbf16>
    %101 = vector.extract_strided_slice %18 {offsets = [8, 8], sizes = [8, 8], strides = [1, 1]} : vector<16x32xbf16> to vector<8x8xbf16>
    %102 = vector.extract_strided_slice %18 {offsets = [8, 16], sizes = [8, 8], strides = [1, 1]} : vector<16x32xbf16> to vector<8x8xbf16>
    %103 = vector.extract_strided_slice %18 {offsets = [8, 24], sizes = [8, 8], strides = [1, 1]} : vector<16x32xbf16> to vector<8x8xbf16>
    %104 = vector.shape_cast %100 : vector<8x8xbf16> to vector<1x8x8xbf16>
    %105 = vector.shape_cast %101 : vector<8x8xbf16> to vector<1x8x8xbf16>
    %106 = vector.shape_cast %102 : vector<8x8xbf16> to vector<1x8x8xbf16>
    %107 = vector.shape_cast %103 : vector<8x8xbf16> to vector<1x8x8xbf16>
    %108 = tpu.concatenate %104, %105, %106, %107 in 0 : vector<1x8x8xbf16>, vector<1x8x8xbf16>, vector<1x8x8xbf16>, vector<1x8x8xbf16> -> vector<4x8x8xbf16>
    %109 = vector.extract_strided_slice %19 {offsets = [8, 0], sizes = [8, 8], strides = [1, 1]} : vector<16x32xbf16> to vector<8x8xbf16>
    %110 = vector.extract_strided_slice %19 {offsets = [8, 8], sizes = [8, 8], strides = [1, 1]} : vector<16x32xbf16> to vector<8x8xbf16>
    %111 = vector.extract_strided_slice %19 {offsets = [8, 16], sizes = [8, 8], strides = [1, 1]} : vector<16x32xbf16> to vector<8x8xbf16>
    %112 = vector.extract_strided_slice %19 {offsets = [8, 24], sizes = [8, 8], strides = [1, 1]} : vector<16x32xbf16> to vector<8x8xbf16>
    %113 = vector.shape_cast %109 : vector<8x8xbf16> to vector<1x8x8xbf16>
    %114 = vector.shape_cast %110 : vector<8x8xbf16> to vector<1x8x8xbf16>
    %115 = vector.shape_cast %111 : vector<8x8xbf16> to vector<1x8x8xbf16>
    %116 = vector.shape_cast %112 : vector<8x8xbf16> to vector<1x8x8xbf16>
    %117 = tpu.concatenate %113, %114, %115, %116 in 0 : vector<1x8x8xbf16>, vector<1x8x8xbf16>, vector<1x8x8xbf16>, vector<1x8x8xbf16> -> vector<4x8x8xbf16>
    "tpu.trace_start"() <{level = 10 : i32, message = "hqd,hkd->hqk"}> : () -> ()
    %cst_32 = arith.constant dense<0.000000e+00> : vector<4x8x8xf32>
    %118 = tpu.matmul %99, %108, %cst_32 {dimension_numbers = #tpu.dot_dimension_numbers<[2], [2], [1], [1], [0, 0, 0, 1, 1, 1], [0], [0]>} : vector<4x8x8xbf16>, vector<4x8x8xbf16>, vector<4x8x8xf32> -> vector<4x8x8xf32>
    "tpu.trace_stop"() : () -> ()
    %cst_33 = arith.constant dense<0xFF800000> : vector<4x8xf32>
    %119 = vector.multi_reduction <maximumf>, %118, %cst_33 [2] : vector<4x8x8xf32> to vector<4x8xf32>
    %120 = vector.shape_cast %119 : vector<4x8xf32> to vector<4x8x1xf32>
    %121 = vector.broadcast %120 : vector<4x8x1xf32> to vector<4x8x8xf32>
    %122 = arith.subf %118, %121 : vector<4x8x8xf32>
    %123 = math.exp %122 : vector<4x8x8xf32>
    %cst_34 = arith.constant dense<0.000000e+00> : vector<4x8xf32>
    %124 = vector.multi_reduction <add>, %123, %cst_34 [2] : vector<4x8x8xf32> to vector<4x8xf32>
    %125 = vector.shape_cast %124 : vector<4x8xf32> to vector<4x8x1xf32>
    %126 = tpu.reciprocal %125 {approx = true} : vector<4x8x1xf32> -> vector<4x8x1xf32>
    %127 = arith.truncf %123 : vector<4x8x8xf32> to vector<4x8x8xbf16>
    "tpu.trace_start"() <{level = 10 : i32, message = "hqk,hkd->hqd"}> : () -> ()
    %cst_35 = arith.constant dense<0.000000e+00> : vector<4x8x8xf32>
    %128 = tpu.matmul %127, %117, %cst_35 {dimension_numbers = #tpu.dot_dimension_numbers<[2], [1], [1], [2], [0, 0, 0, 1, 1, 2], [0], [0]>} : vector<4x8x8xbf16>, vector<4x8x8xbf16>, vector<4x8x8xf32> -> vector<4x8x8xf32>
    "tpu.trace_stop"() : () -> ()
    %129 = vector.broadcast %126 : vector<4x8x1xf32> to vector<4x8x8xf32>
    %130 = arith.mulf %128, %129 : vector<4x8x8xf32>
    %131 = arith.truncf %130 : vector<4x8x8xf32> to vector<4x8x8xbf16>
    %132 = vector.extract_strided_slice %131 {offsets = [0, 0, 0], sizes = [1, 8, 8], strides = [1, 1, 1]} : vector<4x8x8xbf16> to vector<1x8x8xbf16>
    %133 = vector.shape_cast %132 : vector<1x8x8xbf16> to vector<8x8xbf16>
    %134 = vector.extract_strided_slice %20 {offsets = [0, 0, 0], sizes = [1, 8, 32], strides = [1, 1, 1]} : vector<4x8x32xbf16> to vector<1x8x32xbf16>
    %135 = vector.shape_cast %134 : vector<1x8x32xbf16> to vector<8x32xbf16>
    %cst_36 = arith.constant dense<0.000000e+00> : vector<8x32xf32>
    %136 = tpu.matmul %133, %135, %cst_36 {dimension_numbers = #tpu.dot_dimension_numbers<[1], [0], [0], [1], [0, 0, 1, 1], [], []>} : vector<8x8xbf16>, vector<8x32xbf16>, vector<8x32xf32> -> vector<8x32xf32>
    %137 = vector.extract_strided_slice %131 {offsets = [1, 0, 0], sizes = [1, 8, 8], strides = [1, 1, 1]} : vector<4x8x8xbf16> to vector<1x8x8xbf16>
    %138 = vector.shape_cast %137 : vector<1x8x8xbf16> to vector<8x8xbf16>
    %139 = vector.extract_strided_slice %20 {offsets = [1, 0, 0], sizes = [1, 8, 32], strides = [1, 1, 1]} : vector<4x8x32xbf16> to vector<1x8x32xbf16>
    %140 = vector.shape_cast %139 : vector<1x8x32xbf16> to vector<8x32xbf16>
    %cst_37 = arith.constant dense<0.000000e+00> : vector<8x32xf32>
    %141 = tpu.matmul %138, %140, %cst_37 {dimension_numbers = #tpu.dot_dimension_numbers<[1], [0], [0], [1], [0, 0, 1, 1], [], []>} : vector<8x8xbf16>, vector<8x32xbf16>, vector<8x32xf32> -> vector<8x32xf32>
    %142 = arith.addf %136, %141 : vector<8x32xf32>
    %143 = vector.extract_strided_slice %131 {offsets = [2, 0, 0], sizes = [1, 8, 8], strides = [1, 1, 1]} : vector<4x8x8xbf16> to vector<1x8x8xbf16>
    %144 = vector.shape_cast %143 : vector<1x8x8xbf16> to vector<8x8xbf16>
    %145 = vector.extract_strided_slice %20 {offsets = [2, 0, 0], sizes = [1, 8, 32], strides = [1, 1, 1]} : vector<4x8x32xbf16> to vector<1x8x32xbf16>
    %146 = vector.shape_cast %145 : vector<1x8x32xbf16> to vector<8x32xbf16>
    %cst_38 = arith.constant dense<0.000000e+00> : vector<8x32xf32>
    %147 = tpu.matmul %144, %146, %cst_38 {dimension_numbers = #tpu.dot_dimension_numbers<[1], [0], [0], [1], [0, 0, 1, 1], [], []>} : vector<8x8xbf16>, vector<8x32xbf16>, vector<8x32xf32> -> vector<8x32xf32>
    %148 = arith.addf %142, %147 : vector<8x32xf32>
    %149 = vector.extract_strided_slice %131 {offsets = [3, 0, 0], sizes = [1, 8, 8], strides = [1, 1, 1]} : vector<4x8x8xbf16> to vector<1x8x8xbf16>
    %150 = vector.shape_cast %149 : vector<1x8x8xbf16> to vector<8x8xbf16>
    %151 = vector.extract_strided_slice %20 {offsets = [3, 0, 0], sizes = [1, 8, 32], strides = [1, 1, 1]} : vector<4x8x32xbf16> to vector<1x8x32xbf16>
    %152 = vector.shape_cast %151 : vector<1x8x32xbf16> to vector<8x32xbf16>
    %cst_39 = arith.constant dense<0.000000e+00> : vector<8x32xf32>
    %153 = tpu.matmul %150, %152, %cst_39 {dimension_numbers = #tpu.dot_dimension_numbers<[1], [0], [0], [1], [0, 0, 1, 1], [], []>} : vector<8x8xbf16>, vector<8x32xbf16>, vector<8x32xf32> -> vector<8x32xf32>
    %154 = arith.addf %148, %153 : vector<8x32xf32>
    %155 = vector.broadcast %21 : vector<1x32xf32> to vector<8x32xf32>
    %156 = arith.addf %154, %155 : vector<8x32xf32>
    %c1 = arith.constant 1 : index
    %c0_40 = arith.constant 0 : index
    %c0_41 = arith.constant 0 : index
    %157 = vector.load %arg10[%c1, %c0_40, %c0_41] : memref<2x8x32xf32, #tpu.memory_space<vmem>>, vector<1x8x32xf32>
    %158 = vector.shape_cast %157 : vector<1x8x32xf32> to vector<8x32xf32>
    %159 = vector.shape_cast %156 : vector<8x32xf32> to vector<1x8x32xf32>
    tpu.vector_store %arg10[%c1, %c0_40, %c0_41], %159 {strides = array<i32>} : memref<2x8x32xf32, #tpu.memory_space<vmem>>, vector<1x8x32xf32>,
    return
  }
  func.func @transform_0(%arg0: i32) -> (i32, i32, i32) {
    %c0_i32 = arith.constant 0 : i32
    %c0_i32_0 = arith.constant 0 : i32
    %c0_i32_1 = arith.constant 0 : i32
    return %arg0, %c0_i32, %c0_i32_0 : i32, i32, i32
  }
  func.func @transform_1(%arg0: i32) -> (i32, i32) {
    %c0_i32 = arith.constant 0 : i32
    %c0_i32_0 = arith.constant 0 : i32
    %c0_i32_1 = arith.constant 0 : i32
    return %c0_i32, %c0_i32_0 : i32, i32
  }
  func.func @transform_2(%arg0: i32) -> (i32, i32) {
    %c0_i32 = arith.constant 0 : i32
    %c0_i32_0 = arith.constant 0 : i32
    %c0_i32_1 = arith.constant 0 : i32
    return %c0_i32, %c0_i32_0 : i32, i32
  }
  func.func @transform_3(%arg0: i32) -> (i32, i32) {
    %c0_i32 = arith.constant 0 : i32
    %c0_i32_0 = arith.constant 0 : i32
    %c0_i32_1 = arith.constant 0 : i32
    return %c0_i32, %c0_i32_0 : i32, i32
  }
  func.func @transform_4(%arg0: i32) -> (i32, i32) {
    %c0_i32 = arith.constant 0 : i32
    %c0_i32_0 = arith.constant 0 : i32
    %c0_i32_1 = arith.constant 0 : i32
    return %c0_i32, %c0_i32_0 : i32, i32
  }
  func.func @transform_5(%arg0: i32) -> (i32, i32) {
    %c0_i32 = arith.constant 0 : i32
    %c0_i32_0 = arith.constant 0 : i32
    %c0_i32_1 = arith.constant 0 : i32
    return %c0_i32, %c0_i32_0 : i32, i32
  }
  func.func @transform_6(%arg0: i32) -> (i32, i32) {
    %c0_i32 = arith.constant 0 : i32
    %c0_i32_0 = arith.constant 0 : i32
    %c0_i32_1 = arith.constant 0 : i32
    return %c0_i32, %c0_i32_0 : i32, i32
  }
  func.func @transform_7(%arg0: i32) -> (i32, i32, i32) {
    %c0_i32 = arith.constant 0 : i32
    %c0_i32_0 = arith.constant 0 : i32
    %c0_i32_1 = arith.constant 0 : i32
    %c0_i32_2 = arith.constant 0 : i32
    return %c0_i32, %c0_i32_0, %c0_i32_1 : i32, i32, i32
  }
  func.func @transform_8(%arg0: i32) -> (i32, i32) {
    %c0_i32 = arith.constant 0 : i32
    %c0_i32_0 = arith.constant 0 : i32
    %c0_i32_1 = arith.constant 0 : i32
    return %c0_i32, %c0_i32_0 : i32, i32
  }
  func.func @transform_9(%arg0: i32) -> (i32, i32, i32) {
    %c0_i32 = arith.constant 0 : i32
    %c0_i32_0 = arith.constant 0 : i32
    %c0_i32_1 = arith.constant 0 : i32
    return %arg0, %c0_i32, %c0_i32_0 : i32, i32, i32
  }
}

</mosaic_0001>

<llo_original>
// kernel: tpu_custom_call.1
$region0: #{tpu_custom_call.1}
  #allocation0 [shape = 'u32[]', space=smem, size = 0x4, offset = 0x4, fixed_abs, tag = 'smem constant byte address 0x4 - core index']
  #allocation1 [shape = 'u32[72,128]{1,0:T(1,128)}', space=vmem, size = 0x9000, scoped, tag = 'internal scratch']
  %s0 = inlined_call_operand.hbm [shape: bf16[2,8,32], index: 0, kind: input, shape index: {}]
  %s1 = inlined_call_operand.hbm [shape: bf16[32,32], index: 1, kind: input, shape index: {}]
  %s2 = inlined_call_operand.vmem [shape: f32[1,32], index: 2, kind: input, shape index: {}]
  %s3 = inlined_call_operand.hbm [shape: bf16[32,32], index: 3, kind: input, shape index: {}]
  %s4 = inlined_call_operand.vmem [shape: f32[1,32], index: 4, kind: input, shape index: {}]
  %s5 = inlined_call_operand.hbm [shape: bf16[32,32], index: 5, kind: input, shape index: {}]
  %s6 = inlined_call_operand.vmem [shape: f32[1,32], index: 6, kind: input, shape index: {}]
  %s7 = inlined_call_operand.hbm [shape: bf16[4,8,32], index: 7, kind: input, shape index: {}]
  %s8 = inlined_call_operand.vmem [shape: f32[1,32], index: 8, kind: input, shape index: {}]
  %s9 = inlined_call_operand.hbm [shape: f32[2,8,32], index: 9, kind: output, shape index: {}]
  %s10 = sld [smem:[#allocation0]]
  $region66: #{tpu_custom_call.1} parent=0
    _
  %s12 = ssub.s32 1, %s10
  %s13 = scalar_select 0, %s12, %s10
  $region1: #{tpu_custom_call.1} parent=0
    #allocation2 [shape = 'u8[4096]{0}', space=vmem, size = 0x1000, scoped, tag = 'input window, operand 0, single buffered']
    #allocation3 [shape = 's32[1]{0}', space=sflag, size = 0x4, scoped, tag = 'scoped memory for tpu_custom_call.1']
    #allocation4 [shape = 's32[1]{0}', space=sflag, size = 0x4, scoped, tag = 'scoped memory for tpu_custom_call.1']
    #allocation5 [shape = 'u8[8192]{0}', space=vmem, size = 0x2000, scoped, tag = 'input window, operand 1, single buffered']
    #allocation6 [shape = 's32[1]{0}', space=sflag, size = 0x4, scoped, tag = 'scoped memory for tpu_custom_call.1']
    #allocation7 [shape = 'u8[8192]{0}', space=vmem, size = 0x2000, scoped, tag = 'input window, operand 3, single buffered']
    #allocation8 [shape = 'u8[8192]{0}', space=vmem, size = 0x2000, scoped, tag = 'input window, operand 5, single buffered']
    #allocation9 [shape = 's32[1]{0}', space=sflag, size = 0x4, scoped, tag = 'scoped memory for tpu_custom_call.1']
    #allocation10 [shape = 'u8[8192]{0}', space=vmem, size = 0x2000, scoped, tag = 'input window, operand 7, single buffered']
    #allocation11 [shape = 'u8[8192]{0}', space=vmem, size = 0x2000, scoped, tag = 'output window, operand 0, single buffered']
    %14 = vsyncpa [#allocation3], 0
    %15 = vsyncpa [#allocation6], 0
    %16 = vsyncpa [#allocation9], 0
    %17 = vsyncpa [#allocation4], 0
    // Predicated region
    $region2: #{tpu_custom_call.1} parent=1 // pred_check
      _
    $region3: #{tpu_custom_call.1} parent=1 // pred_check_branch
      %19 = sbr.rel (0) target = $region5
    $region4: #{tpu_custom_call.1} parent=1 // pred_region
      %21 = vsyncadd [#allocation3], 0
      %s22 = sshll.u32 %s0, 4
      %s23 = int_to_ptr.hbm [resolvable:$true] %s22
      %s24 = sshll.u32 [#allocation2], 4
      %s25 = int_to_ptr.vmem [resolvable:$true] %s24
      %30 = dma.hbm_to_vmem [thread:$0]  %s23, 128, %s25, [#allocation3], 64, 64, 4
    $region5: #{tpu_custom_call.1} parent=1 // pred_fallthru
      _
    // Predicated region
    $region6: #{tpu_custom_call.1} parent=1 // pred_check
      _
    $region7: #{tpu_custom_call.1} parent=1 // pred_check_branch
      %32 = sbr.rel (0) target = $region9
    $region8: #{tpu_custom_call.1} parent=1 // pred_region
      %34 = vsyncadd [#allocation6], 0
      %s35 = sshll.u32 %s1, 4
      %s36 = int_to_ptr.hbm [resolvable:$true] %s35
      %s37 = sshll.u32 [#allocation5], 4
      %s38 = int_to_ptr.vmem [resolvable:$true] %s37
      %43 = dma.hbm_to_vmem [thread:$0]  %s36, 256, %s38, [#allocation6], 64, 64, 4
    $region9: #{tpu_custom_call.1} parent=1 // pred_fallthru
      _
    // Predicated region
    $region10: #{tpu_custom_call.1} parent=1 // pred_check
      _
    $region11: #{tpu_custom_call.1} parent=1 // pred_check_branch
      %45 = sbr.rel (0) target = $region13
    $region12: #{tpu_custom_call.1} parent=1 // pred_region
      _
    $region13: #{tpu_custom_call.1} parent=1 // pred_fallthru
      _
    // Predicated region
    $region14: #{tpu_custom_call.1} parent=1 // pred_check
      _
    $region15: #{tpu_custom_call.1} parent=1 // pred_check_branch
      %47 = sbr.rel (0) target = $region17
    $region16: #{tpu_custom_call.1} parent=1 // pred_region
      %49 = vsyncadd [#allocation6], 0
      %s50 = sshll.u32 %s3, 4
      %s51 = int_to_ptr.hbm [resolvable:$true] %s50
      %s52 = sshll.u32 [#allocation7], 4
      %s53 = int_to_ptr.vmem [resolvable:$true] %s52
      %58 = dma.hbm_to_vmem [thread:$0]  %s51, 256, %s53, [#allocation6], 64, 64, 4
    $region17: #{tpu_custom_call.1} parent=1 // pred_fallthru
      _
    // Predicated region
    $region18: #{tpu_custom_call.1} parent=1 // pred_check
      _
    $region19: #{tpu_custom_call.1} parent=1 // pred_check_branch
      %60 = sbr.rel (0) target = $region21
    $region20: #{tpu_custom_call.1} parent=1 // pred_region
      _
    $region21: #{tpu_custom_call.1} parent=1 // pred_fallthru
      _
    // Predicated region
    $region22: #{tpu_custom_call.1} parent=1 // pred_check
      _
    $region23: #{tpu_custom_call.1} parent=1 // pred_check_branch
      %62 = sbr.rel (0) target = $region25
    $region24: #{tpu_custom_call.1} parent=1 // pred_region
      %64 = vsyncadd [#allocation9], 0
      %s65 = sshll.u32 %s5, 4
      %s66 = int_to_ptr.hbm [resolvable:$true] %s65
      %s67 = sshll.u32 [#allocation8], 4
      %s68 = int_to_ptr.vmem [resolvable:$true] %s67
      %73 = dma.hbm_to_vmem [thread:$0]  %s66, 256, %s68, [#allocation9], 64, 64, 4
    $region25: #{tpu_custom_call.1} parent=1 // pred_fallthru
      _
    // Predicated region
    $region26: #{tpu_custom_call.1} parent=1 // pred_check
      _
    $region27: #{tpu_custom_call.1} parent=1 // pred_check_branch
      %75 = sbr.rel (0) target = $region29
    $region28: #{tpu_custom_call.1} parent=1 // pred_region
      _
    $region29: #{tpu_custom_call.1} parent=1 // pred_fallthru
      _
    // Predicated region
    $region30: #{tpu_custom_call.1} parent=1 // pred_check
      _
    $region31: #{tpu_custom_call.1} parent=1 // pred_check_branch
      %77 = sbr.rel (0) target = $region33
    $region32: #{tpu_custom_call.1} parent=1 // pred_region
      %79 = vsyncadd [#allocation9], 0
      %s80 = sshll.u32 %s7, 4
      %s81 = int_to_ptr.hbm [resolvable:$true] %s80
      %s82 = sshll.u32 [#allocation10], 4
      %s83 = int_to_ptr.vmem [resolvable:$true] %s82
      %88 = dma.hbm_to_vmem [thread:$0]  %s81, 256, %s83, [#allocation9], 64, 64, 4
    $region33: #{tpu_custom_call.1} parent=1 // pred_fallthru
      _
    // Predicated region
    $region34: #{tpu_custom_call.1} parent=1 // pred_check
      _
    $region35: #{tpu_custom_call.1} parent=1 // pred_check_branch
      %90 = sbr.rel (0) target = $region37
    $region36: #{tpu_custom_call.1} parent=1 // pred_region
      _
    $region37: #{tpu_custom_call.1} parent=1 // pred_fallthru
      _
    // Predicated region
    $region38: #{tpu_custom_call.1} parent=1 // pred_check
      _
    $region39: #{tpu_custom_call.1} parent=1 // pred_check_branch
      %92 = sbr.rel (0) target = $region41
    $region40: #{tpu_custom_call.1} parent=1 // pred_region
      %94 = dma.done [#allocation3], 128
    $region41: #{tpu_custom_call.1} parent=1 // pred_fallthru
      _
    // Predicated region
    $region42: #{tpu_custom_call.1} parent=1 // pred_check
      _
    $region43: #{tpu_custom_call.1} parent=1 // pred_check_branch
      %96 = sbr.rel (0) target = $region45
    $region44: #{tpu_custom_call.1} parent=1 // pred_region
      %98 = dma.done [#allocation6], 256
    $region45: #{tpu_custom_call.1} parent=1 // pred_fallthru
      _
    // Predicated region
    $region46: #{tpu_custom_call.1} parent=1 // pred_check
      _
    $region47: #{tpu_custom_call.1} parent=1 // pred_check_branch
      %100 = sbr.rel (0) target = $region49
    $region48: #{tpu_custom_call.1} parent=1 // pred_region
      %102 = dma.done [#allocation6], 256
    $region49: #{tpu_custom_call.1} parent=1 // pred_fallthru
      _
    // Predicated region
    $region50: #{tpu_custom_call.1} parent=1 // pred_check
      _
    $region51: #{tpu_custom_call.1} parent=1 // pred_check_branch
      %104 = sbr.rel (0) target = $region53
    $region52: #{tpu_custom_call.1} parent=1 // pred_region
      %106 = dma.done [#allocation9], 256
    $region53: #{tpu_custom_call.1} parent=1 // pred_fallthru
      _
    // Predicated region
    $region54: #{tpu_custom_call.1} parent=1 // pred_check
      _
    $region55: #{tpu_custom_call.1} parent=1 // pred_check_branch
      %108 = sbr.rel (0) target = $region57
    $region56: #{tpu_custom_call.1} parent=1 // pred_region
      %110 = dma.done [#allocation9], 256
    $region57: #{tpu_custom_call.1} parent=1 // pred_fallthru
      _
    %v112 = vld [vmem:[#allocation2] sm:$0xf]
    %v113 = vld [vmem:[#allocation2 + $0x4] sm:$0xf]
    %v114 = vld [vmem:[#allocation5] sm:$0xf]
    %v115 = vld [vmem:[#allocation5 + $0x4] sm:$0xf]
    %v116 = vld [vmem:[#allocation5 + $0x8] sm:$0xf]
    %v117 = vld [vmem:[#allocation5 + $0xc] sm:$0xf]
    %v118 = vld [vmem:[%s2] sm:$0x1]
    %v120 = vperm.slane %v118, 0
    %v124 = vunpack.c.l.b16 %v112
    %v125 = vunpack.c.l.b16 %v113
    %v126 = vpack.c.b16 %v125, %v124
    %v131 = vunpack.c.l.b16 %v114
    %v132 = vunpack.c.l.b16 %v115
    %v133 = vunpack.c.l.b16 %v116
    %v134 = vunpack.c.l.b16 %v117
    %v135 = vpack.c.b16 %v132, %v131
    %v136 = vpack.c.b16 %v134, %v133
    %vm139 = vcmask 261120
    %v141 = vsel %vm139, %v126, 0
    %143 = vmatpush.bf16.msra.mxu0 0
    %144 = vmatpush.bf16.msra.mxu0 0
    %145 = vmatpush.bf16.msra.mxu0 0
    %146 = vmatpush.bf16.msra.mxu0 0
    %147 = vmatpush.bf16.msra.mxu0 0
    %148 = vmatpush.bf16.msra.mxu0 0
    %149 = vmatpush.bf16.msra.mxu0 %v136
    %150 = vmatpush.bf16.msra.mxu0 %v135
    %151 = vmatmul.bf16.gmra.mxu0 %v141
    %v152 = vpop.f32.mrf.mxu0
    %v153 = vadd.f32 %v120, %v152
    %v154 = vpop.f32.mrf.mxu0
    %v155 = vadd.f32 %v120, %v154
    %156 = vdwg.mxu0
    %v157 = vld [vmem:[#allocation7] sm:$0xf]
    %v158 = vld [vmem:[#allocation7 + $0x4] sm:$0xf]
    %v159 = vld [vmem:[#allocation7 + $0x8] sm:$0xf]
    %v160 = vld [vmem:[#allocation7 + $0xc] sm:$0xf]
    %v161 = vld [vmem:[%s4] sm:$0x1]
    %v163 = vperm.slane %v161, 0
    %v169 = vunpack.c.l.b16 %v157
    %v170 = vunpack.c.l.b16 %v158
    %v171 = vunpack.c.l.b16 %v159
    %v172 = vunpack.c.l.b16 %v160
    %v173 = vpack.c.b16 %v170, %v169
    %v174 = vpack.c.b16 %v172, %v171
    %177 = vmatpush.bf16.msra.mxu0 0
    %178 = vmatpush.bf16.msra.mxu0 0
    %179 = vmatpush.bf16.msra.mxu0 0
    %180 = vmatpush.bf16.msra.mxu0 0
    %181 = vmatpush.bf16.msra.mxu0 0
    %182 = vmatpush.bf16.msra.mxu0 0
    %183 = vmatpush.bf16.msra.mxu0 %v174
    %184 = vmatpush.bf16.msra.mxu0 %v173
    %185 = vmatmul.bf16.gmra.mxu0 %v141
    %v186 = vpop.f32.mrf.mxu0
    %v187 = vadd.f32 %v163, %v186
    %v188 = vpop.f32.mrf.mxu0
    %v189 = vadd.f32 %v163, %v188
    %190 = vdwg.mxu0
    %v191 = vld [vmem:[#allocation8] sm:$0xf]
    %v192 = vld [vmem:[#allocation8 + $0x4] sm:$0xf]
    %v193 = vld [vmem:[#allocation8 + $0x8] sm:$0xf]
    %v194 = vld [vmem:[#allocation8 + $0xc] sm:$0xf]
    %v195 = vld [vmem:[%s6] sm:$0x1]
    %v197 = vperm.slane %v195, 0
    %v203 = vunpack.c.l.b16 %v191
    %v204 = vunpack.c.l.b16 %v192
    %v205 = vunpack.c.l.b16 %v193
    %v206 = vunpack.c.l.b16 %v194
    %v207 = vpack.c.b16 %v204, %v203
    %v208 = vpack.c.b16 %v206, %v205
    %211 = vmatpush.bf16.msra.mxu0 0
    %212 = vmatpush.bf16.msra.mxu0 0
    %213 = vmatpush.bf16.msra.mxu0 0
    %214 = vmatpush.bf16.msra.mxu0 0
    %215 = vmatpush.bf16.msra.mxu0 0
    %216 = vmatpush.bf16.msra.mxu0 0
    %217 = vmatpush.bf16.msra.mxu0 %v208
    %218 = vmatpush.bf16.msra.mxu0 %v207
    %219 = vmatmul.bf16.gmra.mxu0 %v141
    %v220 = vpop.f32.mrf.mxu0
    %v221 = vadd.f32 %v197, %v220
    %v222 = vpop.f32.mrf.mxu0
    %v223 = vadd.f32 %v197, %v222
    %224 = vdwg.mxu0
    %v225 = vpack.c.bf16 %v153, %v153
    %v226 = vpack.c.bf16 %v155, %v155
    %v227 = vpack.c.bf16 %v187, %v187
    %v228 = vpack.c.bf16 %v189, %v189
    %v229 = vpack.c.bf16 %v221, %v221
    %v230 = vpack.c.bf16 %v223, %v223
    %v231 = vld [vmem:[#allocation10] sm:$0xf]
    %v232 = vld [vmem:[#allocation10 + $0x4] sm:$0xf]
    %v233 = vld [vmem:[#allocation10 + $0x8] sm:$0xf]
    %v234 = vld [vmem:[#allocation10 + $0xc] sm:$0xf]
    %v235 = vld [vmem:[%s8] sm:$0x1]
    %237 = vrot.lane.b32.xlu0 %v225, 120
    %v238 = vpop.permute.xlu0 %237
    %239 = vrot.lane.b32.xlu0 %v225, 112
    %v240 = vpop.permute.xlu0 %239
    %241 = vrot.lane.b32.xlu0 %v225, 104
    %v242 = vpop.permute.xlu0 %241
    %244 = vrot.lane.b32.xlu0 %v227, 120
    %v245 = vpop.permute.xlu0 %244
    %246 = vrot.lane.b32.xlu0 %v227, 112
    %v247 = vpop.permute.xlu0 %246
    %248 = vrot.lane.b32.xlu0 %v227, 104
    %v249 = vpop.permute.xlu0 %248
    %251 = vrot.lane.b32.xlu0 %v229, 120
    %v252 = vpop.permute.xlu0 %251
    %253 = vrot.lane.b32.xlu0 %v229, 112
    %v254 = vpop.permute.xlu0 %253
    %255 = vrot.lane.b32.xlu0 %v229, 104
    %v256 = vpop.permute.xlu0 %255
    %vm257 = vcmask 64512
    %v259 = vsel %vm257, %v225, 0
    %v262 = vsel %vm257, %v227, 0
    %264 = vmatpush.bf16.xpose.msra.mxu0 0
    %265 = vmatpush.bf16.xpose.msra.mxu0 0
    %266 = vmatpush.bf16.xpose.msra.mxu0 0
    %267 = vmatpush.bf16.xpose.msra.mxu0 0
    %268 = vmatpush.bf16.xpose.msra.mxu0 0
    %269 = vmatpush.bf16.xpose.msra.mxu0 0
    %270 = vmatpush.bf16.xpose.msra.mxu0 0
    %271 = vmatpush.bf16.xpose.msra.mxu0 %v262
    %272 = vmatmul.bf16.gmra.mxu0 %v259
    %v273 = vpop.f32.mrf.mxu0
    %v274 = vadd.f32 0.0, %v273
    %v275 = vpop.f32.mrf.mxu0
    %276 = vdwg.mxu0
    %v278 = vsel %vm257, %v238, 0
    %v281 = vsel %vm257, %v245, 0
    %283 = vmatpush.bf16.xpose.msra.mxu0 0
    %284 = vmatpush.bf16.xpose.msra.mxu0 0
    %285 = vmatpush.bf16.xpose.msra.mxu0 0
    %286 = vmatpush.bf16.xpose.msra.mxu0 0
    %287 = vmatpush.bf16.xpose.msra.mxu0 0
    %288 = vmatpush.bf16.xpose.msra.mxu0 0
    %289 = vmatpush.bf16.xpose.msra.mxu0 0
    %290 = vmatpush.bf16.xpose.msra.mxu0 %v281
    %291 = vmatmul.bf16.gmra.mxu0 %v278
    %v292 = vpop.f32.mrf.mxu0
    %v293 = vadd.f32 0.0, %v292
    %v294 = vpop.f32.mrf.mxu0
    %295 = vdwg.mxu0
    %v297 = vsel %vm257, %v240, 0
    %v300 = vsel %vm257, %v247, 0
    %302 = vmatpush.bf16.xpose.msra.mxu0 0
    %303 = vmatpush.bf16.xpose.msra.mxu0 0
    %304 = vmatpush.bf16.xpose.msra.mxu0 0
    %305 = vmatpush.bf16.xpose.msra.mxu0 0
    %306 = vmatpush.bf16.xpose.msra.mxu0 0
    %307 = vmatpush.bf16.xpose.msra.mxu0 0
    %308 = vmatpush.bf16.xpose.msra.mxu0 0
    %309 = vmatpush.bf16.xpose.msra.mxu0 %v300
    %310 = vmatmul.bf16.gmra.mxu0 %v297
    %v311 = vpop.f32.mrf.mxu0
    %v312 = vadd.f32 0.0, %v311
    %v313 = vpop.f32.mrf.mxu0
    %314 = vdwg.mxu0
    %v316 = vsel %vm257, %v242, 0
    %v319 = vsel %vm257, %v249, 0
    %321 = vmatpush.bf16.xpose.msra.mxu0 0
    %322 = vmatpush.bf16.xpose.msra.mxu0 0
    %323 = vmatpush.bf16.xpose.msra.mxu0 0
    %324 = vmatpush.bf16.xpose.msra.mxu0 0
    %325 = vmatpush.bf16.xpose.msra.mxu0 0
    %326 = vmatpush.bf16.xpose.msra.mxu0 0
    %327 = vmatpush.bf16.xpose.msra.mxu0 0
    %328 = vmatpush.bf16.xpose.msra.mxu0 %v319
    %329 = vmatmul.bf16.gmra.mxu0 %v316
    %v330 = vpop.f32.mrf.mxu0
    %v331 = vadd.f32 0.0, %v330
    %v332 = vpop.f32.mrf.mxu0
    %333 = vdwg.mxu0
    %v334 = vsel %vm257, %v274, -inf
    %335 = vmax.xlane.f32.xlu0 %v334
    %v336 = vpop.xlane.xlu0 %335
    %v337 = vsel %vm257, %v293, -inf
    %338 = vmax.xlane.f32.xlu0 %v337
    %v339 = vpop.xlane.xlu0 %338
    %v340 = vsel %vm257, %v312, -inf
    %341 = vmax.xlane.f32.xlu0 %v340
    %v342 = vpop.xlane.xlu0 %341
    %v343 = vsel %vm257, %v331, -inf
    %344 = vmax.xlane.f32.xlu0 %v343
    %v345 = vpop.xlane.xlu0 %344
    %v346 = vsub.f32 %v274, %v336
    %v347 = vsub.f32 %v293, %v339
    %v348 = vsub.f32 %v312, %v342
    %v349 = vsub.f32 %v331, %v345
    %v350 = vmul.f32 %v346, 1.442695
    %v351 = vpow.pop %v350
    %v352 = vmul.f32 %v347, 1.442695
    %v353 = vpow.pop %v352
    %v354 = vmul.f32 %v348, 1.442695
    %v355 = vpow.pop %v354
    %v356 = vmul.f32 %v349, 1.442695
    %v357 = vpow.pop %v356
    %v358 = vsel %vm257, %v351, 0.0
    %359 = vadd.xlane.f32.xlu0 %v358
    %v360 = vpop.xlane.xlu0 %359
    %v361 = vsel %vm257, %v353, 0.0
    %362 = vadd.xlane.f32.xlu0 %v361
    %v363 = vpop.xlane.xlu0 %362
    %v364 = vsel %vm257, %v355, 0.0
    %365 = vadd.xlane.f32.xlu0 %v364
    %v366 = vpop.xlane.xlu0 %365
    %v367 = vsel %vm257, %v357, 0.0
    %368 = vadd.xlane.f32.xlu0 %v367
    %v369 = vpop.xlane.xlu0 %368
    %v370 = vrcp.pop %v360
    %v371 = vrcp.pop %v363
    %v372 = vrcp.pop %v366
    %v373 = vrcp.pop %v369
    %v374 = vpack.c.bf16 %v351, %v351
    %v375 = vpack.c.bf16 %v353, %v353
    %v376 = vpack.c.bf16 %v355, %v355
    %v377 = vpack.c.bf16 %v357, %v357
    %v379 = vsel %vm257, %v374, 0
    %vm381 = vcmask 1043456
    %v383 = vsel %vm381, %v229, 0
    %385 = vmatpush.bf16.msra.mxu0 0
    %386 = vmatpush.bf16.msra.mxu0 0
    %387 = vmatpush.bf16.msra.mxu0 0
    %388 = vmatpush.bf16.msra.mxu0 0
    %389 = vmatpush.bf16.msra.mxu0 0
    %390 = vmatpush.bf16.msra.mxu0 0
    %391 = vmatpush.bf16.msra.mxu0 0
    %392 = vmatpush.bf16.msra.mxu0 %v383
    %393 = vmatmul.bf16.gmra.mxu0 %v379
    %v394 = vpop.f32.mrf.mxu0
    %v395 = vadd.f32 0.0, %v394
    %v396 = vpop.f32.mrf.mxu0
    %397 = vdwg.mxu0
    %v399 = vsel %vm257, %v375, 0
    %v402 = vsel %vm381, %v252, 0
    %404 = vmatpush.bf16.msra.mxu0 0
    %405 = vmatpush.bf16.msra.mxu0 0
    %406 = vmatpush.bf16.msra.mxu0 0
    %407 = vmatpush.bf16.msra.mxu0 0
    %408 = vmatpush.bf16.msra.mxu0 0
    %409 = vmatpush.bf16.msra.mxu0 0
    %410 = vmatpush.bf16.msra.mxu0 0
    %411 = vmatpush.bf16.msra.mxu0 %v402
    %412 = vmatmul.bf16.gmra.mxu0 %v399
    %v413 = vpop.f32.mrf.mxu0
    %v414 = vadd.f32 0.0, %v413
    %v415 = vpop.f32.mrf.mxu0
    %416 = vdwg.mxu0
    %v418 = vsel %vm257, %v376, 0
    %v421 = vsel %vm381, %v254, 0
    %423 = vmatpush.bf16.msra.mxu0 0
    %424 = vmatpush.bf16.msra.mxu0 0
    %425 = vmatpush.bf16.msra.mxu0 0
    %426 = vmatpush.bf16.msra.mxu0 0
    %427 = vmatpush.bf16.msra.mxu0 0
    %428 = vmatpush.bf16.msra.mxu0 0
    %429 = vmatpush.bf16.msra.mxu0 0
    %430 = vmatpush.bf16.msra.mxu0 %v421
    %431 = vmatmul.bf16.gmra.mxu0 %v418
    %v432 = vpop.f32.mrf.mxu0
    %v433 = vadd.f32 0.0, %v432
    %v434 = vpop.f32.mrf.mxu0
    %435 = vdwg.mxu0
    %v437 = vsel %vm257, %v377, 0
    %v440 = vsel %vm381, %v256, 0
    %442 = vmatpush.bf16.msra.mxu0 0
    %443 = vmatpush.bf16.msra.mxu0 0
    %444 = vmatpush.bf16.msra.mxu0 0
    %445 = vmatpush.bf16.msra.mxu0 0
    %446 = vmatpush.bf16.msra.mxu0 0
    %447 = vmatpush.bf16.msra.mxu0 0
    %448 = vmatpush.bf16.msra.mxu0 0
    %449 = vmatpush.bf16.msra.mxu0 %v440
    %450 = vmatmul.bf16.gmra.mxu0 %v437
    %v451 = vpop.f32.mrf.mxu0
    %v452 = vadd.f32 0.0, %v451
    %v453 = vpop.f32.mrf.mxu0
    %454 = vdwg.mxu0
    %v455 = vmul.f32 %v395, %v370
    %v456 = vmul.f32 %v414, %v371
    %v457 = vmul.f32 %v433, %v372
    %v458 = vmul.f32 %v452, %v373
    %v459 = vpack.c.bf16 %v455, %v455
    %v460 = vpack.c.bf16 %v456, %v456
    %v461 = vpack.c.bf16 %v457, %v457
    %v462 = vpack.c.bf16 %v458, %v458
    %v464 = vsel %vm257, %v460, 0
    %v467 = vsel %vm381, %v232, 0
    %469 = vmatpush.bf16.msra.mxu0 0
    %470 = vmatpush.bf16.msra.mxu0 0
    %471 = vmatpush.bf16.msra.mxu0 0
    %472 = vmatpush.bf16.msra.mxu0 0
    %473 = vmatpush.bf16.msra.mxu0 0
    %474 = vmatpush.bf16.msra.mxu0 0
    %475 = vmatpush.bf16.msra.mxu0 0
    %476 = vmatpush.bf16.msra.mxu0 %v467
    %477 = vmatmul.bf16.gmra.mxu0 %v464
    %v478 = vpop.f32.mrf.mxu0
    %v479 = vadd.f32 0.0, %v478
    %v480 = vpop.f32.mrf.mxu0
    %481 = vdwg.mxu0
    %v483 = vsel %vm257, %v459, 0
    %v486 = vsel %vm381, %v231, 0
    %488 = vmatpush.bf16.msra.mxu0 0
    %489 = vmatpush.bf16.msra.mxu0 0
    %490 = vmatpush.bf16.msra.mxu0 0
    %491 = vmatpush.bf16.msra.mxu0 0
    %492 = vmatpush.bf16.msra.mxu0 0
    %493 = vmatpush.bf16.msra.mxu0 0
    %494 = vmatpush.bf16.msra.mxu0 0
    %495 = vmatpush.bf16.msra.mxu0 %v486
    %496 = vmatmul.bf16.gmra.mxu0 %v483
    %v497 = vpop.f32.mrf.mxu0
    %v498 = vadd.f32 %v479, %v497
    %v499 = vpop.f32.mrf.mxu0
    %500 = vdwg.mxu0
    %v502 = vsel %vm257, %v461, 0
    %v505 = vsel %vm381, %v233, 0
    %507 = vmatpush.bf16.msra.mxu0 0
    %508 = vmatpush.bf16.msra.mxu0 0
    %509 = vmatpush.bf16.msra.mxu0 0
    %510 = vmatpush.bf16.msra.mxu0 0
    %511 = vmatpush.bf16.msra.mxu0 0
    %512 = vmatpush.bf16.msra.mxu0 0
    %513 = vmatpush.bf16.msra.mxu0 0
    %514 = vmatpush.bf16.msra.mxu0 %v505
    %515 = vmatmul.bf16.gmra.mxu0 %v502
    %v516 = vpop.f32.mrf.mxu0
    %v517 = vadd.f32 0.0, %v516
    %v518 = vpop.f32.mrf.mxu0
    %519 = vdwg.mxu0
    %v520 = vadd.f32 %v498, %v517
    %v522 = vsel %vm257, %v462, 0
    %v525 = vsel %vm381, %v234, 0
    %527 = vmatpush.bf16.msra.mxu0 0
    %528 = vmatpush.bf16.msra.mxu0 0
    %529 = vmatpush.bf16.msra.mxu0 0
    %530 = vmatpush.bf16.msra.mxu0 0
    %531 = vmatpush.bf16.msra.mxu0 0
    %532 = vmatpush.bf16.msra.mxu0 0
    %533 = vmatpush.bf16.msra.mxu0 0
    %534 = vmatpush.bf16.msra.mxu0 %v525
    %535 = vmatmul.bf16.gmra.mxu0 %v522
    %v536 = vpop.f32.mrf.mxu0
    %v537 = vadd.f32 0.0, %v536
    %v538 = vpop.f32.mrf.mxu0
    %539 = vdwg.mxu0
    %v540 = vadd.f32 %v520, %v537
    %v542 = vperm.slane %v235, 0
    %v544 = vadd.f32 %v540, %v542
    %545 = vst.msk [vmem:[#allocation11] sm:$0xff] %vm139, %v544
    %547 = vrot.lane.b32.xlu0 %v226, 120
    %v548 = vpop.permute.xlu0 %547
    %549 = vrot.lane.b32.xlu0 %v226, 112
    %v550 = vpop.permute.xlu0 %549
    %551 = vrot.lane.b32.xlu0 %v226, 104
    %v552 = vpop.permute.xlu0 %551
    %554 = vrot.lane.b32.xlu0 %v228, 120
    %v555 = vpop.permute.xlu0 %554
    %556 = vrot.lane.b32.xlu0 %v228, 112
    %v557 = vpop.permute.xlu0 %556
    %558 = vrot.lane.b32.xlu0 %v228, 104
    %v559 = vpop.permute.xlu0 %558
    %561 = vrot.lane.b32.xlu0 %v230, 120
    %v562 = vpop.permute.xlu0 %561
    %563 = vrot.lane.b32.xlu0 %v230, 112
    %v564 = vpop.permute.xlu0 %563
    %565 = vrot.lane.b32.xlu0 %v230, 104
    %v566 = vpop.permute.xlu0 %565
    %v568 = vsel %vm257, %v226, 0
    %v571 = vsel %vm257, %v228, 0
    %573 = vmatpush.bf16.xpose.msra.mxu0 0
    %574 = vmatpush.bf16.xpose.msra.mxu0 0
    %575 = vmatpush.bf16.xpose.msra.mxu0 0
    %576 = vmatpush.bf16.xpose.msra.mxu0 0
    %577 = vmatpush.bf16.xpose.msra.mxu0 0
    %578 = vmatpush.bf16.xpose.msra.mxu0 0
    %579 = vmatpush.bf16.xpose.msra.mxu0 0
    %580 = vmatpush.bf16.xpose.msra.mxu0 %v571
    %581 = vmatmul.bf16.gmra.mxu0 %v568
    %v582 = vpop.f32.mrf.mxu0
    %v583 = vadd.f32 0.0, %v582
    %v584 = vpop.f32.mrf.mxu0
    %585 = vdwg.mxu0
    %v587 = vsel %vm257, %v548, 0
    %v590 = vsel %vm257, %v555, 0
    %592 = vmatpush.bf16.xpose.msra.mxu0 0
    %593 = vmatpush.bf16.xpose.msra.mxu0 0
    %594 = vmatpush.bf16.xpose.msra.mxu0 0
    %595 = vmatpush.bf16.xpose.msra.mxu0 0
    %596 = vmatpush.bf16.xpose.msra.mxu0 0
    %597 = vmatpush.bf16.xpose.msra.mxu0 0
    %598 = vmatpush.bf16.xpose.msra.mxu0 0
    %599 = vmatpush.bf16.xpose.msra.mxu0 %v590
    %600 = vmatmul.bf16.gmra.mxu0 %v587
    %v601 = vpop.f32.mrf.mxu0
    %v602 = vadd.f32 0.0, %v601
    %v603 = vpop.f32.mrf.mxu0
    %604 = vdwg.mxu0
    %v606 = vsel %vm257, %v550, 0
    %v609 = vsel %vm257, %v557, 0
    %611 = vmatpush.bf16.xpose.msra.mxu0 0
    %612 = vmatpush.bf16.xpose.msra.mxu0 0
    %613 = vmatpush.bf16.xpose.msra.mxu0 0
    %614 = vmatpush.bf16.xpose.msra.mxu0 0
    %615 = vmatpush.bf16.xpose.msra.mxu0 0
    %616 = vmatpush.bf16.xpose.msra.mxu0 0
    %617 = vmatpush.bf16.xpose.msra.mxu0 0
    %618 = vmatpush.bf16.xpose.msra.mxu0 %v609
    %619 = vmatmul.bf16.gmra.mxu0 %v606
    %v620 = vpop.f32.mrf.mxu0
    %v621 = vadd.f32 0.0, %v620
    %v622 = vpop.f32.mrf.mxu0
    %623 = vdwg.mxu0
    %v625 = vsel %vm257, %v552, 0
    %v628 = vsel %vm257, %v559, 0
    %630 = vmatpush.bf16.xpose.msra.mxu0 0
    %631 = vmatpush.bf16.xpose.msra.mxu0 0
    %632 = vmatpush.bf16.xpose.msra.mxu0 0
    %633 = vmatpush.bf16.xpose.msra.mxu0 0
    %634 = vmatpush.bf16.xpose.msra.mxu0 0
    %635 = vmatpush.bf16.xpose.msra.mxu0 0
    %636 = vmatpush.bf16.xpose.msra.mxu0 0
    %637 = vmatpush.bf16.xpose.msra.mxu0 %v628
    %638 = vmatmul.bf16.gmra.mxu0 %v625
    %v639 = vpop.f32.mrf.mxu0
    %v640 = vadd.f32 0.0, %v639
    %v641 = vpop.f32.mrf.mxu0
    %642 = vdwg.mxu0
    %v643 = vsel %vm257, %v583, -inf
    %644 = vmax.xlane.f32.xlu0 %v643
    %v645 = vpop.xlane.xlu0 %644
    %v646 = vsel %vm257, %v602, -inf
    %647 = vmax.xlane.f32.xlu0 %v646
    %v648 = vpop.xlane.xlu0 %647
    %v649 = vsel %vm257, %v621, -inf
    %650 = vmax.xlane.f32.xlu0 %v649
    %v651 = vpop.xlane.xlu0 %650
    %v652 = vsel %vm257, %v640, -inf
    %653 = vmax.xlane.f32.xlu0 %v652
    %v654 = vpop.xlane.xlu0 %653
    %v655 = vsub.f32 %v583, %v645
    %v656 = vsub.f32 %v602, %v648
    %v657 = vsub.f32 %v621, %v651
    %v658 = vsub.f32 %v640, %v654
    %v659 = vmul.f32 %v655, 1.442695
    %v660 = vpow.pop %v659
    %v661 = vmul.f32 %v656, 1.442695
    %v662 = vpow.pop %v661
    %v663 = vmul.f32 %v657, 1.442695
    %v664 = vpow.pop %v663
    %v665 = vmul.f32 %v658, 1.442695
    %v666 = vpow.pop %v665
    %v667 = vsel %vm257, %v660, 0.0
    %668 = vadd.xlane.f32.xlu0 %v667
    %v669 = vpop.xlane.xlu0 %668
    %v670 = vsel %vm257, %v662, 0.0
    %671 = vadd.xlane.f32.xlu0 %v670
    %v672 = vpop.xlane.xlu0 %671
    %v673 = vsel %vm257, %v664, 0.0
    %674 = vadd.xlane.f32.xlu0 %v673
    %v675 = vpop.xlane.xlu0 %674
    %v676 = vsel %vm257, %v666, 0.0
    %677 = vadd.xlane.f32.xlu0 %v676
    %v678 = vpop.xlane.xlu0 %677
    %v679 = vrcp.pop %v669
    %v680 = vrcp.pop %v672
    %v681 = vrcp.pop %v675
    %v682 = vrcp.pop %v678
    %v683 = vpack.c.bf16 %v660, %v660
    %v684 = vpack.c.bf16 %v662, %v662
    %v685 = vpack.c.bf16 %v664, %v664
    %v686 = vpack.c.bf16 %v666, %v666
    %v688 = vsel %vm257, %v683, 0
    %v691 = vsel %vm381, %v230, 0
    %693 = vmatpush.bf16.msra.mxu0 0
    %694 = vmatpush.bf16.msra.mxu0 0
    %695 = vmatpush.bf16.msra.mxu0 0
    %696 = vmatpush.bf16.msra.mxu0 0
    %697 = vmatpush.bf16.msra.mxu0 0
    %698 = vmatpush.bf16.msra.mxu0 0
    %699 = vmatpush.bf16.msra.mxu0 0
    %700 = vmatpush.bf16.msra.mxu0 %v691
    %701 = vmatmul.bf16.gmra.mxu0 %v688
    %v702 = vpop.f32.mrf.mxu0
    %v703 = vadd.f32 0.0, %v702
    %v704 = vpop.f32.mrf.mxu0
    %705 = vdwg.mxu0
    %v707 = vsel %vm257, %v684, 0
    %v710 = vsel %vm381, %v562, 0
    %712 = vmatpush.bf16.msra.mxu0 0
    %713 = vmatpush.bf16.msra.mxu0 0
    %714 = vmatpush.bf16.msra.mxu0 0
    %715 = vmatpush.bf16.msra.mxu0 0
    %716 = vmatpush.bf16.msra.mxu0 0
    %717 = vmatpush.bf16.msra.mxu0 0
    %718 = vmatpush.bf16.msra.mxu0 0
    %719 = vmatpush.bf16.msra.mxu0 %v710
    %720 = vmatmul.bf16.gmra.mxu0 %v707
    %v721 = vpop.f32.mrf.mxu0
    %v722 = vadd.f32 0.0, %v721
    %v723 = vpop.f32.mrf.mxu0
    %724 = vdwg.mxu0
    %v726 = vsel %vm257, %v685, 0
    %v729 = vsel %vm381, %v564, 0
    %731 = vmatpush.bf16.msra.mxu0 0
    %732 = vmatpush.bf16.msra.mxu0 0
    %733 = vmatpush.bf16.msra.mxu0 0
    %734 = vmatpush.bf16.msra.mxu0 0
    %735 = vmatpush.bf16.msra.mxu0 0
    %736 = vmatpush.bf16.msra.mxu0 0
    %737 = vmatpush.bf16.msra.mxu0 0
    %738 = vmatpush.bf16.msra.mxu0 %v729
    %739 = vmatmul.bf16.gmra.mxu0 %v726
    %v740 = vpop.f32.mrf.mxu0
    %v741 = vadd.f32 0.0, %v740
    %v742 = vpop.f32.mrf.mxu0
    %743 = vdwg.mxu0
    %v745 = vsel %vm257, %v686, 0
    %v748 = vsel %vm381, %v566, 0
    %750 = vmatpush.bf16.msra.mxu0 0
    %751 = vmatpush.bf16.msra.mxu0 0
    %752 = vmatpush.bf16.msra.mxu0 0
    %753 = vmatpush.bf16.msra.mxu0 0
    %754 = vmatpush.bf16.msra.mxu0 0
    %755 = vmatpush.bf16.msra.mxu0 0
    %756 = vmatpush.bf16.msra.mxu0 0
    %757 = vmatpush.bf16.msra.mxu0 %v748
    %758 = vmatmul.bf16.gmra.mxu0 %v745
    %v759 = vpop.f32.mrf.mxu0
    %v760 = vadd.f32 0.0, %v759
    %v761 = vpop.f32.mrf.mxu0
    %762 = vdwg.mxu0
    %v763 = vmul.f32 %v703, %v679
    %v764 = vmul.f32 %v722, %v680
    %v765 = vmul.f32 %v741, %v681
    %v766 = vmul.f32 %v760, %v682
    %v767 = vpack.c.bf16 %v763, %v763
    %v768 = vpack.c.bf16 %v764, %v764
    %v769 = vpack.c.bf16 %v765, %v765
    %v770 = vpack.c.bf16 %v766, %v766
    %v772 = vsel %vm257, %v768, 0
    %774 = vmatpush.bf16.msra.mxu0 0
    %775 = vmatpush.bf16.msra.mxu0 0
    %776 = vmatpush.bf16.msra.mxu0 0
    %777 = vmatpush.bf16.msra.mxu0 0
    %778 = vmatpush.bf16.msra.mxu0 0
    %779 = vmatpush.bf16.msra.mxu0 0
    %780 = vmatpush.bf16.msra.mxu0 0
    %781 = vmatpush.bf16.msra.mxu0 %v467
    %782 = vmatmul.bf16.gmra.mxu0 %v772
    %v783 = vpop.f32.mrf.mxu0
    %v784 = vadd.f32 0.0, %v783
    %v785 = vpop.f32.mrf.mxu0
    %786 = vdwg.mxu0
    %v788 = vsel %vm257, %v767, 0
    %790 = vmatpush.bf16.msra.mxu0 0
    %791 = vmatpush.bf16.msra.mxu0 0
    %792 = vmatpush.bf16.msra.mxu0 0
    %793 = vmatpush.bf16.msra.mxu0 0
    %794 = vmatpush.bf16.msra.mxu0 0
    %795 = vmatpush.bf16.msra.mxu0 0
    %796 = vmatpush.bf16.msra.mxu0 0
    %797 = vmatpush.bf16.msra.mxu0 %v486
    %798 = vmatmul.bf16.gmra.mxu0 %v788
    %v799 = vpop.f32.mrf.mxu0
    %v800 = vadd.f32 %v784, %v799
    %v801 = vpop.f32.mrf.mxu0
    %802 = vdwg.mxu0
    %v804 = vsel %vm257, %v769, 0
    %806 = vmatpush.bf16.msra.mxu0 0
    %807 = vmatpush.bf16.msra.mxu0 0
    %808 = vmatpush.bf16.msra.mxu0 0
    %809 = vmatpush.bf16.msra.mxu0 0
    %810 = vmatpush.bf16.msra.mxu0 0
    %811 = vmatpush.bf16.msra.mxu0 0
    %812 = vmatpush.bf16.msra.mxu0 0
    %813 = vmatpush.bf16.msra.mxu0 %v505
    %814 = vmatmul.bf16.gmra.mxu0 %v804
    %v815 = vpop.f32.mrf.mxu0
    %v816 = vadd.f32 0.0, %v815
    %v817 = vpop.f32.mrf.mxu0
    %818 = vdwg.mxu0
    %v819 = vadd.f32 %v800, %v816
    %v821 = vsel %vm257, %v770, 0
    %823 = vmatpush.bf16.msra.mxu0 0
    %824 = vmatpush.bf16.msra.mxu0 0
    %825 = vmatpush.bf16.msra.mxu0 0
    %826 = vmatpush.bf16.msra.mxu0 0
    %827 = vmatpush.bf16.msra.mxu0 0
    %828 = vmatpush.bf16.msra.mxu0 0
    %829 = vmatpush.bf16.msra.mxu0 0
    %830 = vmatpush.bf16.msra.mxu0 %v525
    %831 = vmatmul.bf16.gmra.mxu0 %v821
    %v832 = vpop.f32.mrf.mxu0
    %v833 = vadd.f32 0.0, %v832
    %v834 = vpop.f32.mrf.mxu0
    %835 = vdwg.mxu0
    %v836 = vadd.f32 %v819, %v833
    %v837 = vadd.f32 %v836, %v542
    %s838 = scalar_lea.vmem [#allocation11], 8
    %839 = vst.msk [vmem:[%s838] sm:$0xff] %vm139, %v837
    // Predicated region
    $region58: #{tpu_custom_call.1} parent=1 // pred_check
      _
    $region59: #{tpu_custom_call.1} parent=1 // pred_check_branch
      %841 = sbr.rel (0) target = $region61
    $region60: #{tpu_custom_call.1} parent=1 // pred_region
      %843 = vsyncadd [#allocation4], 0
      %s844 = sshll.u32 [#allocation11], 4
      %s845 = int_to_ptr.vmem [resolvable:$true] %s844
      %s846 = sshll.u32 %s9, 4
      %s847 = int_to_ptr.hbm [resolvable:$true] %s846
      %852 = dma.vmem_to_hbm [thread:$0]  %s845, 256, %s847, [#allocation4], 128, 128, 8
    $region61: #{tpu_custom_call.1} parent=1 // pred_fallthru
      _
    // Predicated region
    $region62: #{tpu_custom_call.1} parent=1 // pred_check
      _
    $region63: #{tpu_custom_call.1} parent=1 // pred_check_branch
      %854 = sbr.rel (0) target = $region65
    $region64: #{tpu_custom_call.1} parent=1 // pred_region
      %856 = dma.done [#allocation4], 256
    $region65: #{tpu_custom_call.1} parent=1 // pred_fallthru
      _
    %857 = vsyncpa [#allocation3], 1
    %858 = vsyncpa [#allocation6], 1
    %859 = vsyncpa [#allocation9], 1
    %860 = vsyncpa [#allocation4], 1

</llo_original>
